<compile_context>
chip_gen: v6e
topology: v6e:2x2x1
jax: 0.10.0
libtpu: 0.0.40
codegen_flags: <defaults>
</compile_context>

<pallas_src>
import jax
import jax.numpy as jnp
import numpy as np
from jax.experimental import pallas as pl
from jax.experimental.pallas import tpu as pltpu


def _make_kernel(hw, hw_pad):
    """Kernel closure; hw/hw_pad are static Python ints."""

    def kernel(x_ref, w1a_ref, w1b_ref, bnb_ref, w2_ref, b2_ref, o_ref):
        x = x_ref[...].astype(jnp.float32)                     # (TB, C, HWp)

        # --- spatial pooling over the (padded) lane axis ---
        if hw_pad != hw:
            lane = jax.lax.broadcasted_iota(jnp.int32, x.shape, 2)
            xm = jnp.where(lane < hw, x, jnp.finfo(jnp.float32).min)
        else:
            xm = x
        mp = jnp.max(xm, axis=-1)                              # (TB, C)  max-pool
        ap = jnp.sum(x, axis=-1) * (1.0 / hw)                  # (TB, C)  avg-pool (pad lanes are 0)

        # --- mlp layer 1: Linear(2C -> hidden, bias=False), BN scale folded into
        #     the weights in the wrapper; only the BN shift remains as a bias ---
        h = (jnp.dot(mp, w1a_ref[...], preferred_element_type=jnp.float32)
             + jnp.dot(ap, w1b_ref[...], preferred_element_type=jnp.float32)
             + bnb_ref[...])                                   # (TB, hidden)
        h = jnp.maximum(h, 0.0)                                # ReLU

        # --- mlp layer 2: Linear(hidden -> C) with bias, then sigmoid gate ---
        y = jnp.dot(h, w2_ref[...], preferred_element_type=jnp.float32) + b2_ref[...]  # (TB, C)
        s = 1.0 / (1.0 + jnp.exp(-y))                          # exp on EUP

        # --- rescale input, broadcasting the per-channel gate over spatial ---
        o_ref[...] = (x * s[:, :, None]).astype(o_ref.dtype)

    return kernel


def channel_attention(x, w1, bn_gamma, bn_beta, bn_mean, bn_var, eps, w2, b2):
    """x: (B, C, H, W) NCHW (same axis convention as the PyTorch module)."""
    B, C, H, W = x.shape
    hw = H * W
    hidden = w1.shape[0]

    # --- pad HW to a multiple of 128 for lane-dense loads/stores ---
    hw_pad = ((hw + 127) // 128) * 128
    xf = x.reshape(B, C, hw)
    if hw_pad != hw:
        xf = jnp.pad(xf, ((0, 0), (0, 0), (0, hw_pad - hw)))   # zero-pad: mean safe, max masked in-kernel

    # --- fold eval-mode BN into the first linear (glue math, plain JAX) ---
    inv_std = 1.0 / jnp.sqrt(bn_var + eps)
    bn_scale = bn_gamma * inv_std                              # (hidden,)
    bn_shift = (bn_beta - bn_mean * bn_gamma * inv_std).reshape(1, hidden)
    w1a = (w1[:, :C] * bn_scale[:, None]).T                    # (C, hidden), acts on max-pool feats
    w1b = (w1[:, C:] * bn_scale[:, None]).T                    # (C, hidden), acts on avg-pool feats
    w2t = w2.T                                                 # (hidden, C)
    b2r = b2.reshape(1, C)

    # --- per-generation batch-tile sizing from VMEM capacity ---
    itemsize = jnp.dtype(x.dtype).itemsize
    try:
        vmem_cap = int(getattr(pltpu.get_tpu_info(), "vmem_capacity_bytes"))
    except Exception:
        vmem_cap = 64 * 1024 * 1024                            # conservative (v7x)
    slab_unit = C * hw_pad * itemsize                          # one image, in OR out
    budget = int(vmem_cap * 0.6)                               # leave headroom for params/compiler
    tb_max = max(1, budget // (4 * slab_unit))                 # 2 buffers x (in + out)
    tb_max = min(tb_max, max(1, B // 2))                       # keep grid >= 2 (v7x has 2 TCs)
    tb = max(d for d in range(1, min(B, tb_max) + 1) if B % d == 0)
    # TODO(synk): two-pass HW-tiled fallback when a single (1, C, HW) slab exceeds the VMEM budget.

    need = 4 * tb * slab_unit + (8 << 20)
    vmem_limit = int(min(max(need, 32 << 20), int(vmem_cap * 0.75)))

    out = pl.pallas_call(
        _make_kernel(hw, hw_pad),
        out_shape=jax.ShapeDtypeStruct((B, C, hw_pad), x.dtype),
        grid=(B // tb,),
        in_specs=[
            pl.BlockSpec((tb, C, hw_pad), lambda b: (b, 0, 0)),   # x batch-tile slab
            pl.BlockSpec((C, hidden), lambda b: (0, 0)),          # w1a (BN-scaled)
            pl.BlockSpec((C, hidden), lambda b: (0, 0)),          # w1b (BN-scaled)
            pl.BlockSpec((1, hidden), lambda b: (0, 0)),          # folded BN shift
            pl.BlockSpec((hidden, C), lambda b: (0, 0)),          # w2^T
            pl.BlockSpec((1, C), lambda b: (0, 0)),               # b2
        ],
        out_specs=pl.BlockSpec((tb, C, hw_pad), lambda b: (b, 0, 0)),
        compiler_params=pltpu.CompilerParams(
            dimension_semantics=("parallel",),
            vmem_limit_bytes=vmem_limit,
        ),
    )(xf, w1a, w1b, bn_shift, w2t, b2r)

    if hw_pad != hw:
        out = out[:, :, :hw]
    return out.reshape(B, C, H, W)


def channel_attention_ref(x, w1, bn_gamma, bn_beta, bn_mean, bn_var, eps, w2, b2):
    """Pure-JAX reference mirroring the PyTorch forward (BN in eval mode)."""
    B, C, H, W = x.shape
    xf = x.reshape(B, C, H * W)
    mp = xf.max(axis=2)
    ap = xf.mean(axis=2)
    feat = jnp.concatenate([mp, ap], axis=1)                   # (B, 2C)
    h = feat @ w1.T                                            # (B, hidden), no bias
    h = (h - bn_mean) / jnp.sqrt(bn_var + eps) * bn_gamma + bn_beta
    h = jnp.maximum(h, 0.0)
    y = h @ w2.T + b2                                          # (B, C)
    scale = jax.nn.sigmoid(y)
    return x * scale[:, :, None, None]


if __name__ == "__main__":
    # small shapes consistent with the module: C must be divisible by reduction_ratio
    B, C, H, W = 2, 32, 16, 16
    reduction_ratio = 8
    hidden = C // reduction_ratio                              # = 4
    eps = 1e-5

    key = jax.random.PRNGKey(0)
    kx, kw1, kw2, kb2 = jax.random.split(key, 4)

    x = jax.random.normal(kx, (B, C, H, W), dtype=jnp.float32)

    # deterministic synthetic parameters (module __init__ shapes)
    w1 = 0.1 * jax.random.normal(kw1, (hidden, 2 * C), dtype=jnp.float32)  # Linear(2C->C/r), bias=False
    w2 = 0.1 * jax.random.normal(kw2, (C, hidden), dtype=jnp.float32)      # Linear(C/r->C)
    b2 = 0.1 * jax.random.normal(kb2, (C,), dtype=jnp.float32)
    # BatchNorm1d params / running stats (eval-mode semantics), nontrivial but deterministic.
    bn_gamma = 1.0 + 0.1 * jnp.arange(hidden, dtype=jnp.float32)
    bn_beta = 0.01 * jnp.arange(hidden, dtype=jnp.float32)
    bn_mean = 0.05 * jnp.arange(hidden, dtype=jnp.float32)
    bn_var = 1.0 + 0.1 * jnp.arange(hidden, dtype=jnp.float32)

    out = channel_attention(x, w1, bn_gamma, bn_beta, bn_mean, bn_var, eps, w2, b2)
    out = jax.block_until_ready(out)

    ref = channel_attention_ref(x, w1, bn_gamma, bn_beta, bn_mean, bn_var, eps, w2, b2)
    np.testing.assert_allclose(np.asarray(out), np.asarray(ref), rtol=1e-5, atol=1e-5)

    print("KERNEL_OK")
</pallas_src>

<mosaic_0001>
module attributes {stable_mosaic.version = 11 : i64} {
  func.func @kernel(%arg0: i32, %arg1: memref<1x32x256xf32, #tpu.memory_space<vmem>>, %arg2: memref<32x4xf32, #tpu.memory_space<vmem>>, %arg3: memref<32x4xf32, #tpu.memory_space<vmem>>, %arg4: memref<1x4xf32, #tpu.memory_space<vmem>>, %arg5: memref<4x32xf32, #tpu.memory_space<vmem>>, %arg6: memref<1x32xf32, #tpu.memory_space<vmem>>, %arg7: memref<1x32x256xf32, #tpu.memory_space<vmem>>) attributes {dimension_semantics = [#tpu.dimension_semantics<parallel>], iteration_bounds = array<i64: 2>, scalar_prefetch = 0 : i64, scratch_operands = 0 : i64, tpu.core_type = #tpu.core_type<tc>, window_params = [{transform_indices = @transform_0, window_bounds = array<i64: 1, 32, 256>}, {pipeline_mode = #tpu.pipeline_mode<synchronous>, transform_indices = @transform_1, window_bounds = array<i64: 32, 4>}, {pipeline_mode = #tpu.pipeline_mode<synchronous>, transform_indices = @transform_2, window_bounds = array<i64: 32, 4>}, {pipeline_mode = #tpu.pipeline_mode<synchronous>, transform_indices = @transform_3, window_bounds = array<i64: 1, 4>}, {pipeline_mode = #tpu.pipeline_mode<synchronous>, transform_indices = @transform_4, window_bounds = array<i64: 4, 32>}, {pipeline_mode = #tpu.pipeline_mode<synchronous>, transform_indices = @transform_5, window_bounds = array<i64: 1, 32>}, {transform_indices = @transform_6, window_bounds = array<i64: 1, 32, 256>}]} {
    %c0 = arith.constant 0 : index
    %c0_0 = arith.constant 0 : index
    %c0_1 = arith.constant 0 : index
    %0 = vector.load %arg1[%c0, %c0_0, %c0_1] : memref<1x32x256xf32, #tpu.memory_space<vmem>>, vector<1x32x256xf32>
    %cst = arith.constant dense<0xFF800000> : vector<1x32xf32>
    %1 = vector.multi_reduction <maximumf>, %0, %cst [2] : vector<1x32x256xf32> to vector<1x32xf32>
    %cst_2 = arith.constant dense<0.000000e+00> : vector<1x32xf32>
    %2 = vector.multi_reduction <add>, %0, %cst_2 [2] : vector<1x32x256xf32> to vector<1x32xf32>
    %cst_3 = arith.constant 3.906250e-03 : f32
    %3 = vector.broadcast %cst_3 : f32 to vector<1x32xf32>
    %4 = arith.mulf %2, %3 : vector<1x32xf32>
    %c0_4 = arith.constant 0 : index
    %c0_5 = arith.constant 0 : index
    %5 = vector.load %arg2[%c0_4, %c0_5] : memref<32x4xf32, #tpu.memory_space<vmem>>, vector<32x4xf32>
    %cst_6 = arith.constant dense<0.000000e+00> : vector<1x4xf32>
    %6 = tpu.matmul %1, %5, %cst_6 {dimension_numbers = #tpu.dot_dimension_numbers<[1], [0], [0], [1], [0, 0, 1, 1], [], []>} : vector<1x32xf32>, vector<32x4xf32>, vector<1x4xf32> -> vector<1x4xf32>
    %c0_7 = arith.constant 0 : index
    %c0_8 = arith.constant 0 : index
    %7 = vector.load %arg3[%c0_7, %c0_8] : memref<32x4xf32, #tpu.memory_space<vmem>>, vector<32x4xf32>
    %cst_9 = arith.constant dense<0.000000e+00> : vector<1x4xf32>
    %8 = tpu.matmul %4, %7, %cst_9 {dimension_numbers = #tpu.dot_dimension_numbers<[1], [0], [0], [1], [0, 0, 1, 1], [], []>} : vector<1x32xf32>, vector<32x4xf32>, vector<1x4xf32> -> vector<1x4xf32>
    %9 = arith.addf %6, %8 : vector<1x4xf32>
    %c0_10 = arith.constant 0 : index
    %c0_11 = arith.constant 0 : index
    %10 = vector.load %arg4[%c0_10, %c0_11] : memref<1x4xf32, #tpu.memory_space<vmem>>, vector<1x4xf32>
    %11 = arith.addf %9, %10 : vector<1x4xf32>
    %cst_12 = arith.constant 0.000000e+00 : f32
    %12 = vector.broadcast %cst_12 : f32 to vector<1x4xf32>
    %13 = arith.maximumf %11, %12 : vector<1x4xf32>
    %c0_13 = arith.constant 0 : index
    %c0_14 = arith.constant 0 : index
    %14 = vector.load %arg5[%c0_13, %c0_14] : memref<4x32xf32, #tpu.memory_space<vmem>>, vector<4x32xf32>
    %cst_15 = arith.constant dense<0.000000e+00> : vector<1x32xf32>
    %15 = tpu.matmul %13, %14, %cst_15 {dimension_numbers = #tpu.dot_dimension_numbers<[1], [0], [0], [1], [0, 0, 1, 1], [], []>} : vector<1x4xf32>, vector<4x32xf32>, vector<1x32xf32> -> vector<1x32xf32>
    %c0_16 = arith.constant 0 : index
    %c0_17 = arith.constant 0 : index
    %16 = vector.load %arg6[%c0_16, %c0_17] : memref<1x32xf32, #tpu.memory_space<vmem>>, vector<1x32xf32>
    %17 = arith.addf %15, %16 : vector<1x32xf32>
    %cst_18 = arith.constant 0.000000e+00 : f32
    %18 = vector.broadcast %cst_18 : f32 to vector<1x32xf32>
    %19 = arith.subf %18, %17 : vector<1x32xf32>
    %20 = math.exp %19 : vector<1x32xf32>
    %cst_19 = arith.constant 1.000000e+00 : f32
    %21 = vector.broadcast %cst_19 : f32 to vector<1x32xf32>
    %22 = arith.addf %21, %20 : vector<1x32xf32>
    %cst_20 = arith.constant 1.000000e+00 : f32
    %23 = vector.broadcast %cst_20 : f32 to vector<1x32xf32>
    %24 = arith.divf %23, %22 : vector<1x32xf32>
    %25 = vector.shape_cast %24 : vector<1x32xf32> to vector<1x32x1xf32>
    %26 = vector.broadcast %25 : vector<1x32x1xf32> to vector<1x32x256xf32>
    %27 = arith.mulf %0, %26 : vector<1x32x256xf32>
    %c0_21 = arith.constant 0 : index
    %c0_22 = arith.constant 0 : index
    %c0_23 = arith.constant 0 : index
    %28 = vector.load %arg7[%c0_21, %c0_22, %c0_23] : memref<1x32x256xf32, #tpu.memory_space<vmem>>, vector<1x32x256xf32>
    tpu.vector_store %arg7[%c0_21, %c0_22, %c0_23], %27 {strides = array<i32>} : memref<1x32x256xf32, #tpu.memory_space<vmem>>, vector<1x32x256xf32>,
    return
  }
  func.func @transform_0(%arg0: i32) -> (i32, i32, i32) {
    %c0_i32 = arith.constant 0 : i32
    %c0_i32_0 = arith.constant 0 : i32
    %c0_i32_1 = arith.constant 0 : i32
    return %arg0, %c0_i32, %c0_i32_0 : i32, i32, i32
  }
  func.func @transform_1(%arg0: i32) -> (i32, i32) {
    %c0_i32 = arith.constant 0 : i32
    %c0_i32_0 = arith.constant 0 : i32
    %c0_i32_1 = arith.constant 0 : i32
    return %c0_i32, %c0_i32_0 : i32, i32
  }
  func.func @transform_2(%arg0: i32) -> (i32, i32) {
    %c0_i32 = arith.constant 0 : i32
    %c0_i32_0 = arith.constant 0 : i32
    %c0_i32_1 = arith.constant 0 : i32
    return %c0_i32, %c0_i32_0 : i32, i32
  }
  func.func @transform_3(%arg0: i32) -> (i32, i32) {
    %c0_i32 = arith.constant 0 : i32
    %c0_i32_0 = arith.constant 0 : i32
    %c0_i32_1 = arith.constant 0 : i32
    return %c0_i32, %c0_i32_0 : i32, i32
  }
  func.func @transform_4(%arg0: i32) -> (i32, i32) {
    %c0_i32 = arith.constant 0 : i32
    %c0_i32_0 = arith.constant 0 : i32
    %c0_i32_1 = arith.constant 0 : i32
    return %c0_i32, %c0_i32_0 : i32, i32
  }
  func.func @transform_5(%arg0: i32) -> (i32, i32) {
    %c0_i32 = arith.constant 0 : i32
    %c0_i32_0 = arith.constant 0 : i32
    %c0_i32_1 = arith.constant 0 : i32
    return %c0_i32, %c0_i32_0 : i32, i32
  }
  func.func @transform_6(%arg0: i32) -> (i32, i32, i32) {
    %c0_i32 = arith.constant 0 : i32
    %c0_i32_0 = arith.constant 0 : i32
    %c0_i32_1 = arith.constant 0 : i32
    return %arg0, %c0_i32, %c0_i32_0 : i32, i32, i32
  }
}

</mosaic_0001>

<llo_original>
// kernel: tpu_custom_call.1
$region0: #{tpu_custom_call.1}
  #allocation0 [shape = 'u32[]', space=smem, size = 0x4, offset = 0x4, fixed_abs, tag = 'smem constant byte address 0x4 - core index']
  #allocation1 [shape = 'u32[144,128]{1,0:T(1,128)}', space=vmem, size = 0x12000, scoped, tag = 'internal scratch']
  %s0 = inlined_call_operand.hbm [shape: f32[2,32,256], index: 0, kind: input, shape index: {}]
  %s1 = inlined_call_operand.vmem [shape: f32[32,4], index: 1, kind: input, shape index: {}]
  %s2 = inlined_call_operand.vmem [shape: f32[32,4], index: 2, kind: input, shape index: {}]
  %s3 = inlined_call_operand.vmem [shape: f32[1,4], index: 3, kind: input, shape index: {}]
  %s4 = inlined_call_operand.vmem [shape: f32[4,32], index: 4, kind: input, shape index: {}]
  %s5 = inlined_call_operand.vmem [shape: f32[1,32], index: 5, kind: input, shape index: {}]
  %s6 = inlined_call_operand.hbm [shape: f32[2,32,256], index: 6, kind: output, shape index: {}]
  %s7 = sld [smem:[#allocation0]]
  $region61: #{tpu_custom_call.1} parent=0
    _
  %s9 = ssub.s32 1, %s7
  %s10 = scalar_select 0, %s9, %s7
  $region1: #{tpu_custom_call.1} parent=0
    #allocation2 [shape = 'u8[65536]{0}', space=vmem, size = 0x10000, scoped, tag = 'input window, operand 0']
    #allocation3 [shape = 's32[2]{0}', space=sflag, size = 0x8, scoped, tag = 'scoped memory for tpu_custom_call.1']
    #allocation4 [shape = 's32[2]{0}', space=sflag, size = 0x8, scoped, tag = 'scoped memory for tpu_custom_call.1']
    #allocation5 [shape = 'u8[65536]{0}', space=vmem, size = 0x10000, scoped, tag = 'output window, operand 0']
    %11 = vsyncpa [#allocation3], 0
    %s12 = scalar_lea.sflag [#allocation3], 1
    %13 = vsyncpa %s12, 0
    %14 = vsyncpa [#allocation4], 0
    %s15 = scalar_lea.sflag [#allocation4], 1
    %16 = vsyncpa %s15, 0
    loop: start=0, step=1, limit=4
    $region2: #{tpu_custom_call.1} parent=1 // loop_pre_header
      _
    $region3: #{tpu_custom_call.1} parent=1 // loop_header
      %s18 = sphi 0, %s22
      %p19 = scmp.ge.s32.totalorder %s18, 4
      %s28 = sphi 0, %s30
      %s31 = sphi 0, %s28
      %s32 = sphi 0, %s31
      %s48 = sphi 0, %s32
      %s52 = sphi 0, %s52
      %s54 = sphi 0, %s52
      %s55 = sphi 0, %s54
      %s69 = sphi 0, %s55
      %s73 = sphi 0, %s73
      %s75 = sphi 0, %s73
      %s76 = sphi 0, %s75
      %s90 = sphi 0, %s76
      %s94 = sphi 0, %s94
      %s96 = sphi 0, %s94
      %s97 = sphi 0, %s96
      %s111 = sphi 0, %s97
      %s115 = sphi 0, %s115
      %s117 = sphi 0, %s115
      %s118 = sphi 0, %s117
      %s132 = sphi 0, %s118
      %s136 = sphi 0, %s136
      %s138 = sphi 0, %s136
      %s139 = sphi 0, %s138
      %s153 = sphi 0, %s139
      %s159 = sphi 0, %s161
      %s162 = sphi 0, %s159
      %s163 = sphi 0, %s162
      %s179 = sphi 0, %s163
    $region4: #{tpu_custom_call.1} parent=1 // loop_header_branch
      %21 = sbr.rel (%p19) target = $region8
    $region5: #{tpu_custom_call.1} parent=1 // loop_body
      %s23 = ssub.s32 %s18, 1
      %s24 = ssub.s32 %s18, 2
      %s25 = sadd.s32 %s18, 1
      %s26 = ssub.s32 %s18, %s25
      %p27 = scmp.eq.s32.totalorder %s26, 0
      %s29 = sadd.s32 %s28, 1
      %s30 = scalar_select %p27, %s28, %s29
      %p33 = pneg %p27
      %p34 = scmp.eq.s32.totalorder %s18, 1
      %p35 = por %p33, %p34
      %p36 = scmp.ne.s32.totalorder %s28, %s31
      %p37 = scmp.eq.s32.totalorder %s18, 0
      %p38 = por %p36, %p37
      %p39 = scmp.ne.s32.totalorder %s28, %s31
      %p40 = scmp.eq.s32.totalorder %s23, 1
      %p41 = por %p39, %p40
      %p42 = scmp.ne.s32.totalorder %s31, %s32
      %p43 = scmp.eq.s32.totalorder %s23, 0
      %p44 = por %p42, %p43
      %p45 = scmp.ne.s32.totalorder %s31, %s32
      %p46 = scmp.eq.s32.totalorder %s24, 1
      %p47 = por %p45, %p46
      %p49 = scmp.ne.s32.totalorder %s32, %s48
      %p50 = scmp.eq.s32.totalorder %s24, 0
      %p51 = por %p49, %p50
      %s53 = sadd.s32 %s52, 1
      %p56 = scmp.eq.s32.totalorder %s18, 1
      %p57 = scmp.ne.s32.totalorder %s52, %s54
      %p58 = scmp.eq.s32.totalorder %s18, 0
      %p59 = por %p57, %p58
      %p60 = scmp.ne.s32.totalorder %s52, %s54
      %p61 = scmp.eq.s32.totalorder %s23, 1
      %p62 = por %p60, %p61
      %p63 = scmp.ne.s32.totalorder %s54, %s55
      %p64 = scmp.eq.s32.totalorder %s23, 0
      %p65 = por %p63, %p64
      %p66 = scmp.ne.s32.totalorder %s54, %s55
      %p67 = scmp.eq.s32.totalorder %s24, 1
      %p68 = por %p66, %p67
      %p70 = scmp.ne.s32.totalorder %s55, %s69
      %p71 = scmp.eq.s32.totalorder %s24, 0
      %p72 = por %p70, %p71
      %s74 = sadd.s32 %s73, 1
      %p77 = scmp.eq.s32.totalorder %s18, 1
      %p78 = scmp.ne.s32.totalorder %s73, %s75
      %p79 = scmp.eq.s32.totalorder %s18, 0
      %p80 = por %p78, %p79
      %p81 = scmp.ne.s32.totalorder %s73, %s75
      %p82 = scmp.eq.s32.totalorder %s23, 1
      %p83 = por %p81, %p82
      %p84 = scmp.ne.s32.totalorder %s75, %s76
      %p85 = scmp.eq.s32.totalorder %s23, 0
      %p86 = por %p84, %p85
      %p87 = scmp.ne.s32.totalorder %s75, %s76
      %p88 = scmp.eq.s32.totalorder %s24, 1
      %p89 = por %p87, %p88
      %p91 = scmp.ne.s32.totalorder %s76, %s90
      %p92 = scmp.eq.s32.totalorder %s24, 0
      %p93 = por %p91, %p92
      %s95 = sadd.s32 %s94, 1
      %p98 = scmp.eq.s32.totalorder %s18, 1
      %p99 = scmp.ne.s32.totalorder %s94, %s96
      %p100 = scmp.eq.s32.totalorder %s18, 0
      %p101 = por %p99, %p100
      %p102 = scmp.ne.s32.totalorder %s94, %s96
      %p103 = scmp.eq.s32.totalorder %s23, 1
      %p104 = por %p102, %p103
      %p105 = scmp.ne.s32.totalorder %s96, %s97
      %p106 = scmp.eq.s32.totalorder %s23, 0
      %p107 = por %p105, %p106
      %p108 = scmp.ne.s32.totalorder %s96, %s97
      %p109 = scmp.eq.s32.totalorder %s24, 1
      %p110 = por %p108, %p109
      %p112 = scmp.ne.s32.totalorder %s97, %s111
      %p113 = scmp.eq.s32.totalorder %s24, 0
      %p114 = por %p112, %p113
      %s116 = sadd.s32 %s115, 1
      %p119 = scmp.eq.s32.totalorder %s18, 1
      %p120 = scmp.ne.s32.totalorder %s115, %s117
      %p121 = scmp.eq.s32.totalorder %s18, 0
      %p122 = por %p120, %p121
      %p123 = scmp.ne.s32.totalorder %s115, %s117
      %p124 = scmp.eq.s32.totalorder %s23, 1
      %p125 = por %p123, %p124
      %p126 = scmp.ne.s32.totalorder %s117, %s118
      %p127 = scmp.eq.s32.totalorder %s23, 0
      %p128 = por %p126, %p127
      %p129 = scmp.ne.s32.totalorder %s117, %s118
      %p130 = scmp.eq.s32.totalorder %s24, 1
      %p131 = por %p129, %p130
      %p133 = scmp.ne.s32.totalorder %s118, %s132
      %p134 = scmp.eq.s32.totalorder %s24, 0
      %p135 = por %p133, %p134
      %s137 = sadd.s32 %s136, 1
      %p140 = scmp.eq.s32.totalorder %s18, 1
      %p141 = scmp.ne.s32.totalorder %s136, %s138
      %p142 = scmp.eq.s32.totalorder %s18, 0
      %p143 = por %p141, %p142
      %p144 = scmp.ne.s32.totalorder %s136, %s138
      %p145 = scmp.eq.s32.totalorder %s23, 1
      %p146 = por %p144, %p145
      %p147 = scmp.ne.s32.totalorder %s138, %s139
      %p148 = scmp.eq.s32.totalorder %s23, 0
      %p149 = por %p147, %p148
      %p150 = scmp.ne.s32.totalorder %s138, %s139
      %p151 = scmp.eq.s32.totalorder %s24, 1
      %p152 = por %p150, %p151
      %p154 = scmp.ne.s32.totalorder %s139, %s153
      %p155 = scmp.eq.s32.totalorder %s24, 0
      %p156 = por %p154, %p155
      %s157 = ssub.s32 %s18, %s25
      %p158 = scmp.eq.s32.totalorder %s157, 0
      %s160 = sadd.s32 %s159, 1
      %s161 = scalar_select %p158, %s159, %s160
      %p164 = pneg %p158
      %p165 = scmp.eq.s32.totalorder %s18, 1
      %p166 = por %p164, %p165
      %p167 = scmp.ne.s32.totalorder %s159, %s162
      %p168 = scmp.eq.s32.totalorder %s18, 0
      %p169 = por %p167, %p168
      %p170 = scmp.ne.s32.totalorder %s159, %s162
      %p171 = scmp.eq.s32.totalorder %s23, 1
      %p172 = por %p170, %p171
      %p173 = scmp.ne.s32.totalorder %s162, %s163
      %p174 = scmp.eq.s32.totalorder %s23, 0
      %p175 = por %p173, %p174
      %p176 = scmp.ne.s32.totalorder %s162, %s163
      %p177 = scmp.eq.s32.totalorder %s24, 1
      %p178 = por %p176, %p177
      %p180 = scmp.ne.s32.totalorder %s163, %s179
      %p181 = scmp.eq.s32.totalorder %s24, 0
      %p182 = por %p180, %p181
      %p183 = scmp.le.s32.totalorder 1, %s18
      %p184 = scmp.lt.s32.totalorder %s18, 3
      %p185 = pnand %p183, %p184
      %p186 = pneg %p185
      // Predicated region
      $region9: #{tpu_custom_call.1} parent=5 // pred_check
        _
      $region10: #{tpu_custom_call.1} parent=5 // pred_check_branch
        %188 = sbr.rel (%p185) target = $region12
      $region11: #{tpu_custom_call.1} parent=5 // pred_region
        %s189 = ssub.s32 %s18, 1
        // Predicated region
        $region13: #{tpu_custom_call.1} parent=11 // pred_check
          %p190 = pneg %p65
        $region14: #{tpu_custom_call.1} parent=11 // pred_check_branch
          %192 = sbr.rel (%p190) target = $region16
        $region15: #{tpu_custom_call.1} parent=11 // pred_region
          _
        $region16: #{tpu_custom_call.1} parent=11 // pred_fallthru
          _
        // Predicated region
        $region17: #{tpu_custom_call.1} parent=11 // pred_check
          %p193 = pneg %p86
        $region18: #{tpu_custom_call.1} parent=11 // pred_check_branch
          %195 = sbr.rel (%p193) target = $region20
        $region19: #{tpu_custom_call.1} parent=11 // pred_region
          _
        $region20: #{tpu_custom_call.1} parent=11 // pred_fallthru
          _
        // Predicated region
        $region21: #{tpu_custom_call.1} parent=11 // pred_check
          %p196 = pneg %p107
        $region22: #{tpu_custom_call.1} parent=11 // pred_check_branch
          %198 = sbr.rel (%p196) target = $region24
        $region23: #{tpu_custom_call.1} parent=11 // pred_region
          _
        $region24: #{tpu_custom_call.1} parent=11 // pred_fallthru
          _
        // Predicated region
        $region25: #{tpu_custom_call.1} parent=11 // pred_check
          %p199 = pneg %p128
        $region26: #{tpu_custom_call.1} parent=11 // pred_check_branch
          %201 = sbr.rel (%p199) target = $region28
        $region27: #{tpu_custom_call.1} parent=11 // pred_region
          _
        $region28: #{tpu_custom_call.1} parent=11 // pred_fallthru
          _
        // Predicated region
        $region29: #{tpu_custom_call.1} parent=11 // pred_check
          %p202 = pneg %p149
        $region30: #{tpu_custom_call.1} parent=11 // pred_check_branch
          %204 = sbr.rel (%p202) target = $region32
        $region31: #{tpu_custom_call.1} parent=11 // pred_region
          _
        $region32: #{tpu_custom_call.1} parent=11 // pred_fallthru
          _
      $region12: #{tpu_custom_call.1} parent=5 // pred_fallthru
        _
      %p205 = scmp.lt.s32.totalorder %s18, 2
      // Predicated region
      $region33: #{tpu_custom_call.1} parent=5 // pred_check
        %p206 = pneg %p205
      $region34: #{tpu_custom_call.1} parent=5 // pred_check_branch
        %208 = sbr.rel (%p206) target = $region36
      $region35: #{tpu_custom_call.1} parent=5 // pred_region
        // Predicated region
        $region37: #{tpu_custom_call.1} parent=35 // pred_check
          %p209 = pneg %p38
        $region38: #{tpu_custom_call.1} parent=35 // pred_check_branch
          %211 = sbr.rel (%p209) target = $region40
        $region39: #{tpu_custom_call.1} parent=35 // pred_region
          %s212 = sand.u32 %s28, 1
          %s213 = scalar_lea.sflag [#allocation3], %s212
          %s214 = sand.u32 %s28, 1
          %s215 = smul.addr %s214, 64
          %s216 = scalar_lea.vmem [#allocation2], %s215
          %s218 = ssub.s32 1024, 1024
          %219 = vsyncadd %s213, %s218
          %s220 = smul.addr %s18, 8
          %s221 = smul.addr %s220, 128
          %s222 = scalar_lea.hbm %s0, %s221
          %s223 = sshll.u32 %s216, 4
          %s224 = int_to_ptr.vmem [resolvable:$true] %s223
          %229 = dma.hbm_to_vmem [thread:$0]  %s222, 1024, %s224, %s213, 256, 256, 16
        $region40: #{tpu_custom_call.1} parent=35 // pred_fallthru
          _
      $region36: #{tpu_custom_call.1} parent=5 // pred_fallthru
        _
      %p230 = scmp.le.s32.totalorder 1, %s18
      %p231 = scmp.lt.s32.totalorder %s18, 3
      %p232 = pnand %p230, %p231
      %p233 = pneg %p232
      // Predicated region
      $region41: #{tpu_custom_call.1} parent=5 // pred_check
        _
      $region42: #{tpu_custom_call.1} parent=5 // pred_check_branch
        %235 = sbr.rel (%p232) target = $region44
      $region43: #{tpu_custom_call.1} parent=5 // pred_region
        %s236 = ssub.s32 %s18, 1
        %s237 = sand.u32 %s31, 1
        %s238 = scalar_lea.sflag [#allocation3], %s237
        %s239 = sand.u32 %s31, 1
        %s240 = smul.addr %s239, 64
        %s241 = scalar_lea.vmem [#allocation2], %s240
        // Predicated region
        $region45: #{tpu_custom_call.1} parent=43 // pred_check
          %p242 = pneg %p44
        $region46: #{tpu_custom_call.1} parent=43 // pred_check_branch
          %244 = sbr.rel (%p242) target = $region48
        $region47: #{tpu_custom_call.1} parent=43 // pred_region
          %245 = dma.done %s238, 1024
        $region48: #{tpu_custom_call.1} parent=43 // pred_fallthru
          _
        %s246 = sand.u32 %s31, 1
        %s247 = scalar_lea.sflag [#allocation3], %s246
        %s248 = sand.u32 %s31, 1
        %s249 = smul.addr %s248, 64
        %s250 = scalar_lea.vmem [#allocation2], %s249
        %p251 = pneg %p44
        %p252 = pneg %p41
        %p253 = pneg %p65
        %p254 = pneg %p62
        %p255 = pneg %p86
        %p256 = pneg %p83
        %p257 = pneg %p107
        %p258 = pneg %p104
        %p259 = pneg %p128
        %p260 = pneg %p125
        %p261 = pneg %p149
        %p262 = pneg %p146
        %p263 = pneg %p175
        %p264 = pneg %p172
        %s265 = sand.u32 %s162, 1
        %s266 = scalar_lea.sflag [#allocation4], %s265
        %s267 = sand.u32 %s162, 1
        %s268 = smul.addr %s267, 64
        %s269 = scalar_lea.vmem [#allocation5], %s268
        %v270 = vld [vmem:[%s241] sm:$0xff]
        %v271 = vld [vmem:[%s241 + $0x8] sm:$0xff]
        %v272 = vld [vmem:[%s241 + $0x10] sm:$0xff]
        %v273 = vld [vmem:[%s241 + $0x18] sm:$0xff]
        %v274 = vld [vmem:[%s241 + $0x20] sm:$0xff]
        %v275 = vld [vmem:[%s241 + $0x28] sm:$0xff]
        %v276 = vld [vmem:[%s241 + $0x30] sm:$0xff]
        %v277 = vld [vmem:[%s241 + $0x38] sm:$0xff]
        %v278 = vmax.f32 %v270, %v271
        %279 = vmax.xlane.f32.xlu0 %v278
        %v280 = vpop.xlane.xlu0 %279
        %v281 = vmax.f32 %v272, %v273
        %282 = vmax.xlane.f32.xlu0 %v281
        %v283 = vpop.xlane.xlu0 %282
        %v284 = vmax.f32 %v274, %v275
        %285 = vmax.xlane.f32.xlu0 %v284
        %v286 = vpop.xlane.xlu0 %285
        %v287 = vmax.f32 %v276, %v277
        %288 = vmax.xlane.f32.xlu0 %v287
        %v289 = vpop.xlane.xlu0 %288
        %v290 = vadd.f32 %v270, %v271
        %291 = vadd.xlane.f32.xlu0 %v290
        %v292 = vpop.xlane.xlu0 %291
        %v293 = vadd.f32 %v272, %v273
        %294 = vadd.xlane.f32.xlu0 %v293
        %v295 = vpop.xlane.xlu0 %294
        %v296 = vadd.f32 %v274, %v275
        %297 = vadd.xlane.f32.xlu0 %v296
        %v298 = vpop.xlane.xlu0 %297
        %v299 = vadd.f32 %v276, %v277
        %300 = vadd.xlane.f32.xlu0 %v299
        %v301 = vpop.xlane.xlu0 %300
        %v302 = vmul.f32 %v292, 0.00390625
        %v303 = vmul.f32 %v295, 0.00390625
        %v304 = vmul.f32 %v298, 0.00390625
        %v305 = vmul.f32 %v301, 0.00390625
        %v306 = vld [vmem:[%s1] sm:$0xff]
        %v307 = vld [vmem:[%s1 + $0x8] sm:$0xff]
        %v308 = vld [vmem:[%s1 + $0x10] sm:$0xff]
        %v309 = vld [vmem:[%s1 + $0x18] sm:$0xff]
        %v310 = vld [vmem:[%s2] sm:$0xff]
        %v311 = vld [vmem:[%s2 + $0x8] sm:$0xff]
        %v312 = vld [vmem:[%s2 + $0x10] sm:$0xff]
        %v313 = vld [vmem:[%s2 + $0x18] sm:$0xff]
        %v318 = vlaneseq
        %v319 = vand.u32 %v318, 127
        %v320 = vlaneseq
        %v321 = vshrl.u32 %v320, 7
        %v322 = vsub.s32 %v319, %v321
        %v323 = vrot.slane %v302, %v322
        %v324 = vadd.s32 %v319, 4294967288
        %v325 = vlaneseq
        %v326 = vshrl.u32 %v325, 7
        %v327 = vsub.s32 %v324, %v326
        %v328 = vrot.slane %v303, %v327
        %vm329 = vcmask 130112
        %v330 = vsel %vm329, %v328, %v323
        %v331 = vadd.s32 %v319, 4294967280
        %v332 = vlaneseq
        %v333 = vshrl.u32 %v332, 7
        %v334 = vsub.s32 %v331, %v333
        %v335 = vrot.slane %v304, %v334
        %vm336 = vcmask 195712
        %v337 = vsel %vm336, %v335, %v330
        %v338 = vadd.s32 %v319, 4294967272
        %v339 = vlaneseq
        %v340 = vshrl.u32 %v339, 7
        %v341 = vsub.s32 %v338, %v340
        %v342 = vrot.slane %v305, %v341
        %vm343 = vcmask 261312
        %v344 = vsel %vm343, %v342, %v337
        %vm345 = vcmask 261120
        %v346 = vsel %vm345, %v344, 0
        %348 = vmatprep.subr.mxu0 0.0
        %349 = vmatpush1.msra.mxu0 0.0
        %350 = vmatprep.subr.mxu0 0.0
        %351 = vmatpush1.msra.mxu0 0.0
        %352 = vmatprep.subr.mxu0 0.0
        %353 = vmatpush1.msra.mxu0 0.0
        %354 = vmatprep.subr.mxu0 0.0
        %355 = vmatpush1.msra.mxu0 0.0
        %356 = vmatprep.subr.mxu0 0.0
        %357 = vmatpush1.msra.mxu0 0.0
        %358 = vmatprep.subr.mxu0 0.0
        %359 = vmatpush1.msra.mxu0 0.0
        %360 = vmatprep.subr.mxu0 0.0
        %361 = vmatpush1.msra.mxu0 0.0
        %362 = vmatprep.subr.mxu0 0.0
        %363 = vmatpush1.msra.mxu0 0.0
        %364 = vmatprep.subr.mxu0 0.0
        %365 = vmatpush1.msra.mxu0 0.0
        %366 = vmatprep.subr.mxu0 0.0
        %367 = vmatpush1.msra.mxu0 0.0
        %368 = vmatprep.subr.mxu0 0.0
        %369 = vmatpush1.msra.mxu0 0.0
        %370 = vmatprep.subr.mxu0 0.0
        %371 = vmatpush1.msra.mxu0 0.0
        %372 = vmatprep.subr.mxu0 0.0
        %373 = vmatpush1.msra.mxu0 %v313
        %374 = vmatprep.subr.mxu0 0.0
        %375 = vmatpush1.msra.mxu0 %v312
        %376 = vmatprep.subr.mxu0 0.0
        %377 = vmatpush1.msra.mxu0 %v311
        %378 = vmatprep.subr.mxu0 0.0
        %379 = vmatpush1.msra.mxu0 %v310
        %380 = vmatprep.subr.mxu0 0.0
        %381 = vmatpush2.msra.mxu0 0.0
        %382 = vmatprep.subr.mxu0 0.0
        %383 = vmatpush2.msra.mxu0 0.0
        %384 = vmatprep.subr.mxu0 0.0
        %385 = vmatpush2.msra.mxu0 0.0
        %386 = vmatprep.subr.mxu0 0.0
        %387 = vmatpush2.msra.mxu0 0.0
        %388 = vmatprep.subr.mxu0 0.0
        %389 = vmatpush2.msra.mxu0 0.0
        %390 = vmatprep.subr.mxu0 0.0
        %391 = vmatpush2.msra.mxu0 0.0
        %392 = vmatprep.subr.mxu0 0.0
        %393 = vmatpush2.msra.mxu0 0.0
        %394 = vmatprep.subr.mxu0 0.0
        %395 = vmatpush2.msra.mxu0 0.0
        %396 = vmatprep.subr.mxu0 0.0
        %397 = vmatpush2.msra.mxu0 0.0
        %398 = vmatprep.subr.mxu0 0.0
        %399 = vmatpush2.msra.mxu0 0.0
        %400 = vmatprep.subr.mxu0 0.0
        %401 = vmatpush2.msra.mxu0 0.0
        %402 = vmatprep.subr.mxu0 0.0
        %403 = vmatpush2.msra.mxu0 0.0
        %404 = vmatprep.subr.mxu0 0.0
        %405 = vmatpush2.msra.mxu0 0.0
        %406 = vmatprep.subr.mxu0 0.0
        %407 = vmatpush2.msra.mxu0 0.0
        %408 = vmatprep.subr.mxu0 0.0
        %409 = vmatpush2.msra.mxu0 0.0
        %410 = vmatprep.subr.mxu0 0.0
        %411 = vmatpush2.msra.mxu0 0.0
        %412 = vmatprep.mubr.f32.mxu0 0.0
        %413 = vmatmul.mubr.f32.gmra.mxu0 %v346
        %v414 = vpop.f32.mrf.mxu0
        %v415 = vadd.f32 0.0, %v414
        %v416 = vpop.f32.mrf.mxu0
        %417 = vdwg.mxu0
        %v422 = vlaneseq
        %v423 = vshrl.u32 %v422, 7
        %v424 = vsub.s32 %v319, %v423
        %v425 = vrot.slane %v280, %v424
        %v426 = vlaneseq
        %v427 = vshrl.u32 %v426, 7
        %v428 = vsub.s32 %v324, %v427
        %v429 = vrot.slane %v283, %v428
        %v430 = vsel %vm329, %v429, %v425
        %v431 = vlaneseq
        %v432 = vshrl.u32 %v431, 7
        %v433 = vsub.s32 %v331, %v432
        %v434 = vrot.slane %v286, %v433
        %v435 = vsel %vm336, %v434, %v430
        %v436 = vlaneseq
        %v437 = vshrl.u32 %v436, 7
        %v438 = vsub.s32 %v338, %v437
        %v439 = vrot.slane %v289, %v438
        %v440 = vsel %vm343, %v439, %v435
        %v441 = vsel %vm345, %v440, 0
        %443 = vmatprep.subr.mxu0 0.0
        %444 = vmatpush1.msra.mxu0 0.0
        %445 = vmatprep.subr.mxu0 0.0
        %446 = vmatpush1.msra.mxu0 0.0
        %447 = vmatprep.subr.mxu0 0.0
        %448 = vmatpush1.msra.mxu0 0.0
        %449 = vmatprep.subr.mxu0 0.0
        %450 = vmatpush1.msra.mxu0 0.0
        %451 = vmatprep.subr.mxu0 0.0
        %452 = vmatpush1.msra.mxu0 0.0
        %453 = vmatprep.subr.mxu0 0.0
        %454 = vmatpush1.msra.mxu0 0.0
        %455 = vmatprep.subr.mxu0 0.0
        %456 = vmatpush1.msra.mxu0 0.0
        %457 = vmatprep.subr.mxu0 0.0
        %458 = vmatpush1.msra.mxu0 0.0
        %459 = vmatprep.subr.mxu0 0.0
        %460 = vmatpush1.msra.mxu0 0.0
        %461 = vmatprep.subr.mxu0 0.0
        %462 = vmatpush1.msra.mxu0 0.0
        %463 = vmatprep.subr.mxu0 0.0
        %464 = vmatpush1.msra.mxu0 0.0
        %465 = vmatprep.subr.mxu0 0.0
        %466 = vmatpush1.msra.mxu0 0.0
        %467 = vmatprep.subr.mxu0 0.0
        %468 = vmatpush1.msra.mxu0 %v309
        %469 = vmatprep.subr.mxu0 0.0
        %470 = vmatpush1.msra.mxu0 %v308
        %471 = vmatprep.subr.mxu0 0.0
        %472 = vmatpush1.msra.mxu0 %v307
        %473 = vmatprep.subr.mxu0 0.0
        %474 = vmatpush1.msra.mxu0 %v306
        %475 = vmatprep.subr.mxu0 0.0
        %476 = vmatpush2.msra.mxu0 0.0
        %477 = vmatprep.subr.mxu0 0.0
        %478 = vmatpush2.msra.mxu0 0.0
        %479 = vmatprep.subr.mxu0 0.0
        %480 = vmatpush2.msra.mxu0 0.0
        %481 = vmatprep.subr.mxu0 0.0
        %482 = vmatpush2.msra.mxu0 0.0
        %483 = vmatprep.subr.mxu0 0.0
        %484 = vmatpush2.msra.mxu0 0.0
        %485 = vmatprep.subr.mxu0 0.0
        %486 = vmatpush2.msra.mxu0 0.0
        %487 = vmatprep.subr.mxu0 0.0
        %488 = vmatpush2.msra.mxu0 0.0
        %489 = vmatprep.subr.mxu0 0.0
        %490 = vmatpush2.msra.mxu0 0.0
        %491 = vmatprep.subr.mxu0 0.0
        %492 = vmatpush2.msra.mxu0 0.0
        %493 = vmatprep.subr.mxu0 0.0
        %494 = vmatpush2.msra.mxu0 0.0
        %495 = vmatprep.subr.mxu0 0.0
        %496 = vmatpush2.msra.mxu0 0.0
        %497 = vmatprep.subr.mxu0 0.0
        %498 = vmatpush2.msra.mxu0 0.0
        %499 = vmatprep.subr.mxu0 0.0
        %500 = vmatpush2.msra.mxu0 0.0
        %501 = vmatprep.subr.mxu0 0.0
        %502 = vmatpush2.msra.mxu0 0.0
        %503 = vmatprep.subr.mxu0 0.0
        %504 = vmatpush2.msra.mxu0 0.0
        %505 = vmatprep.subr.mxu0 0.0
        %506 = vmatpush2.msra.mxu0 0.0
        %507 = vmatprep.mubr.f32.mxu0 0.0
        %508 = vmatmul.mubr.f32.gmra.mxu0 %v441
        %v509 = vpop.f32.mrf.mxu0
        %v510 = vadd.f32 %v415, %v509
        %v511 = vpop.f32.mrf.mxu0
        %512 = vdwg.mxu0
        %v513 = vld [vmem:[%s3] sm:$0x1]
        %v514 = vadd.f32 %v510, %v513
        %v515 = vmax.f32 %v514, 0.0
        %v516 = vld [vmem:[%s4] sm:$0xf]
        %v517 = vld [vmem:[%s5] sm:$0x1]
        %vm518 = vcmask 31744
        %v520 = vsel %vm518, %v515, 0
        %vm522 = vcmask 1043456
        %v524 = vsel %vm522, %v516, 0
        %526 = vmatprep.subr.mxu0 0.0
        %527 = vmatpush1.msra.mxu0 0.0
        %528 = vmatprep.subr.mxu0 0.0
        %529 = vmatpush1.msra.mxu0 0.0
        %530 = vmatprep.subr.mxu0 0.0
        %531 = vmatpush1.msra.mxu0 0.0
        %532 = vmatprep.subr.mxu0 0.0
        %533 = vmatpush1.msra.mxu0 0.0
        %534 = vmatprep.subr.mxu0 0.0
        %535 = vmatpush1.msra.mxu0 0.0
        %536 = vmatprep.subr.mxu0 0.0
        %537 = vmatpush1.msra.mxu0 0.0
        %538 = vmatprep.subr.mxu0 0.0
        %539 = vmatpush1.msra.mxu0 0.0
        %540 = vmatprep.subr.mxu0 0.0
        %541 = vmatpush1.msra.mxu0 0.0
        %542 = vmatprep.subr.mxu0 0.0
        %543 = vmatpush1.msra.mxu0 0.0
        %544 = vmatprep.subr.mxu0 0.0
        %545 = vmatpush1.msra.mxu0 0.0
        %546 = vmatprep.subr.mxu0 0.0
        %547 = vmatpush1.msra.mxu0 0.0
        %548 = vmatprep.subr.mxu0 0.0
        %549 = vmatpush1.msra.mxu0 0.0
        %550 = vmatprep.subr.mxu0 0.0
        %551 = vmatpush1.msra.mxu0 0.0
        %552 = vmatprep.subr.mxu0 0.0
        %553 = vmatpush1.msra.mxu0 0.0
        %554 = vmatprep.subr.mxu0 0.0
        %555 = vmatpush1.msra.mxu0 0.0
        %556 = vmatprep.subr.mxu0 0.0
        %557 = vmatpush1.msra.mxu0 %v524
        %558 = vmatprep.subr.mxu0 0.0
        %559 = vmatpush2.msra.mxu0 0.0
        %560 = vmatprep.subr.mxu0 0.0
        %561 = vmatpush2.msra.mxu0 0.0
        %562 = vmatprep.subr.mxu0 0.0
        %563 = vmatpush2.msra.mxu0 0.0
        %564 = vmatprep.subr.mxu0 0.0
        %565 = vmatpush2.msra.mxu0 0.0
        %566 = vmatprep.subr.mxu0 0.0
        %567 = vmatpush2.msra.mxu0 0.0
        %568 = vmatprep.subr.mxu0 0.0
        %569 = vmatpush2.msra.mxu0 0.0
        %570 = vmatprep.subr.mxu0 0.0
        %571 = vmatpush2.msra.mxu0 0.0
        %572 = vmatprep.subr.mxu0 0.0
        %573 = vmatpush2.msra.mxu0 0.0
        %574 = vmatprep.subr.mxu0 0.0
        %575 = vmatpush2.msra.mxu0 0.0
        %576 = vmatprep.subr.mxu0 0.0
        %577 = vmatpush2.msra.mxu0 0.0
        %578 = vmatprep.subr.mxu0 0.0
        %579 = vmatpush2.msra.mxu0 0.0
        %580 = vmatprep.subr.mxu0 0.0
        %581 = vmatpush2.msra.mxu0 0.0
        %582 = vmatprep.subr.mxu0 0.0
        %583 = vmatpush2.msra.mxu0 0.0
        %584 = vmatprep.subr.mxu0 0.0
        %585 = vmatpush2.msra.mxu0 0.0
        %586 = vmatprep.subr.mxu0 0.0
        %587 = vmatpush2.msra.mxu0 0.0
        %588 = vmatprep.subr.mxu0 0.0
        %589 = vmatpush2.msra.mxu0 0.0
        %590 = vmatprep.mubr.f32.mxu0 0.0
        %591 = vmatmul.mubr.f32.gmra.mxu0 %v520
        %v592 = vpop.f32.mrf.mxu0
        %v593 = vadd.f32 %v517, %v592
        %v594 = vpop.f32.mrf.mxu0
        %595 = vdwg.mxu0
        %v596 = vsub.f32 0.0, %v593
        %v597 = vmul.f32 %v596, 1.442695
        %v598 = vpow.pop %v597
        %v599 = vadd.f32 %v598, 1.0
        %v600 = vrcp.pop %v599
        %v601 = vmul.f32 1.0, %v600
        %v602 = vlaneseq
        %v603 = vshrl.u32 %v602, 7
        %v604 = vsub.s32 0, %v603
        %v605 = vrot.slane %v601, %v604
        %607 = vbcast.lane.b32.xlu0 %v605, 256
        %v608 = vpop.permute.xlu0 %607
        %s610 = sor.u32 256, 8
        %611 = vbcast.lane.b32.xlu0 %v605, %s610
        %v612 = vpop.permute.xlu0 %611
        %s614 = sor.u32 256, 16
        %615 = vbcast.lane.b32.xlu0 %v605, %s614
        %v616 = vpop.permute.xlu0 %615
        %s618 = sor.u32 256, 24
        %619 = vbcast.lane.b32.xlu0 %v605, %s618
        %v620 = vpop.permute.xlu0 %619
        %v621 = vmul.f32 %v270, %v608
        %v622 = vmul.f32 %v271, %v608
        %v623 = vmul.f32 %v272, %v612
        %v624 = vmul.f32 %v273, %v612
        %v625 = vmul.f32 %v274, %v616
        %v626 = vmul.f32 %v275, %v616
        %v627 = vmul.f32 %v276, %v620
        %v628 = vmul.f32 %v277, %v620
        %629 = vst [vmem:[%s269] sm:$0xff] %v621
        %630 = vst [vmem:[%s269 + $0x8] sm:$0xff] %v622
        %631 = vst [vmem:[%s269 + $0x10] sm:$0xff] %v623
        %632 = vst [vmem:[%s269 + $0x18] sm:$0xff] %v624
        %633 = vst [vmem:[%s269 + $0x20] sm:$0xff] %v625
        %634 = vst [vmem:[%s269 + $0x28] sm:$0xff] %v626
        %635 = vst [vmem:[%s269 + $0x30] sm:$0xff] %v627
        %636 = vst [vmem:[%s269 + $0x38] sm:$0xff] %v628
        %s637 = sand.u32 %s162, 1
        %s638 = scalar_lea.sflag [#allocation4], %s637
        %s639 = sand.u32 %s162, 1
        %s640 = smul.addr %s639, 64
        %s641 = scalar_lea.vmem [#allocation5], %s640
        // Predicated region
        $region49: #{tpu_custom_call.1} parent=43 // pred_check
          %p642 = pneg %p172
        $region50: #{tpu_custom_call.1} parent=43 // pred_check_branch
          %644 = sbr.rel (%p642) target = $region52
        $region51: #{tpu_custom_call.1} parent=43 // pred_region
          %s646 = ssub.s32 1024, 1024
          %647 = vsyncadd %s638, %s646
          %s648 = smul.addr %s23, 8
          %s649 = smul.addr %s648, 128
          %s650 = scalar_lea.hbm %s6, %s649
          %s651 = sshll.u32 %s641, 4
          %s652 = int_to_ptr.vmem [resolvable:$true] %s651
          %657 = dma.vmem_to_hbm [thread:$0]  %s652, 1024, %s650, %s638, 256, 256, 16
        $region52: #{tpu_custom_call.1} parent=43 // pred_fallthru
          _
      $region44: #{tpu_custom_call.1} parent=5 // pred_fallthru
        _
      %p658 = scmp.le.s32.totalorder 2, %s18
      // Predicated region
      $region53: #{tpu_custom_call.1} parent=5 // pred_check
        %p659 = pneg %p658
      $region54: #{tpu_custom_call.1} parent=5 // pred_check_branch
        %661 = sbr.rel (%p659) target = $region56
      $region55: #{tpu_custom_call.1} parent=5 // pred_region
        %s662 = ssub.s32 %s18, 2
        // Predicated region
        $region57: #{tpu_custom_call.1} parent=55 // pred_check
          %p663 = pneg %p178
        $region58: #{tpu_custom_call.1} parent=55 // pred_check_branch
          %665 = sbr.rel (%p663) target = $region60
        $region59: #{tpu_custom_call.1} parent=55 // pred_region
          %s666 = sand.u32 %s163, 1
          %s667 = scalar_lea.sflag [#allocation4], %s666
          %s668 = sand.u32 %s163, 1
          %s669 = smul.addr %s668, 64
          %s670 = scalar_lea.vmem [#allocation5], %s669
          %671 = dma.done %s667, 1024
        $region60: #{tpu_custom_call.1} parent=55 // pred_fallthru
          _
      $region56: #{tpu_custom_call.1} parent=5 // pred_fallthru
        _
    $region6: #{tpu_custom_call.1} parent=1 // loop_footer
      %s22 = sadd.s32 1, %s18
    $region7: #{tpu_custom_call.1} parent=1 // loop_footer_branch
      %17 = sbr.rel target = $region3
    $region8: #{tpu_custom_call.1} parent=1 // loop_exit
      _
    %672 = vsyncpa [#allocation3], 1
    %s673 = scalar_lea.sflag [#allocation3], 1
    %674 = vsyncpa %s673, 1
    %675 = vsyncpa [#allocation4], 1
    %s676 = scalar_lea.sflag [#allocation4], 1
    %677 = vsyncpa %s676, 1

</llo_original>
